<compile_context>
chip_gen: v5e
topology: v5e:2x2
jax: 0.10.0
libtpu: 0.0.40
codegen_flags: <defaults>
</compile_context>

<pallas_src>
from functools import partial

import jax
import jax.numpy as jnp
from jax import lax
from jax.experimental import pallas as pl
from jax.experimental.pallas import tpu as pltpu


def _make_kf_kernel(Bp, dx, n_steps, alpha_sq):
    """Build a fused n-step predict kernel for padded batch Bp and state dim dx."""

    def kernel(f_ref, x_ref, p_ref, q_ref, x_out_ref, p_out_ref, stk_ref):
        F = f_ref[...]                       # (dx, dx) f32, loaded once
        Q = q_ref[...]                       # (dx, dx) f32, loaded once

        # x / P stay resident in VMEM (the output refs) across all fused steps.
        x_out_ref[...] = x_ref[...]
        p_out_ref[...] = p_ref[...]

        def one_step():
            # FP = F @ P   (first MXU pass)
            FP = jnp.dot(F, p_out_ref[...], preferred_element_type=jnp.float32)

            # Stack [X ; FP] along sublanes, then ONE contraction against F's 2nd dim:
            #   rows 0..Bp-1:   x_new[b, j] = sum_k x[b, k]  * F[j, k]  == (F @ x_b)[j]
            #   rows Bp..Bp+dx: (F P F^T)[i, j] = sum_k FP[i, k] * F[j, k]
            stk_ref[0:Bp, :] = x_out_ref[...]
            stk_ref[Bp:Bp + dx, :] = FP
            res = lax.dot_general(
                stk_ref[...], F,
                dimension_numbers=(((1,), (1,)), ((), ())),   # contract dim 1 of both (no F.T materialized)
                preferred_element_type=jnp.float32,
            )

            x_out_ref[...] = res[0:Bp, :]
            p_new = res[Bp:Bp + dx, :]
            if alpha_sq != 1.0:              # no VPU multiply emitted when alpha_sq == 1.0
                p_new = alpha_sq * p_new
            p_out_ref[...] = p_new + Q

        if n_steps <= 4:
            for _ in range(n_steps):         # short fixed trip count: static unroll
                one_step()
        else:
            @pl.loop(0, n_steps)
            def _(_step):
                one_step()

    return kernel


@partial(jax.jit, static_argnames=("n_steps", "alpha_sq"), donate_argnums=(2,))
def _kf_predict_call(F, x_rows, P, Q, *, n_steps, alpha_sq):
    dx = F.shape[0]
    Bp = x_rows.shape[0]                     # already padded to a multiple of 8
    mat_spec = pl.BlockSpec((dx, dx), lambda: (0, 0))
    vec_spec = pl.BlockSpec((Bp, dx), lambda: (0, 0))
    return pl.pallas_call(
        _make_kf_kernel(Bp, dx, n_steps, alpha_sq),
        out_shape=(
            jax.ShapeDtypeStruct((Bp, dx), jnp.float32),   # x after n_steps (lane-dense rows)
            jax.ShapeDtypeStruct((dx, dx), jnp.float32),   # P after n_steps
        ),
        in_specs=[mat_spec, vec_spec, mat_spec, mat_spec],
        out_specs=(vec_spec, mat_spec),
        scratch_shapes=[pltpu.VMEM((Bp + dx, dx), jnp.float32)],  # sublane-stacked [X ; FP]
        # P is input index 2, P_new is output index 1: update covariance in place.
        input_output_aliases={2: 1},
    )(F, x_rows, P, Q)


def kalman_predict(F, x, P, Q, *, n_steps=1, alpha_sq=1.0):
    """n_steps fused applications of KalmanFilterModule.forward. Returns (x_new, P_new).

    x may be (dim_x,) — exact module semantics — or (B, dim_x): B states sharing F/P/Q.
    NOTE: P is donated (covariance updated in place); do not reuse the passed-in P after.
    """
    dx = F.shape[0]
    assert F.shape == (dx, dx) and P.shape == (dx, dx) and Q.shape == (dx, dx)
    x = jnp.asarray(x, jnp.float32)
    single = x.ndim == 1
    x_rows = x.reshape(1, dx) if single else x
    B = x_rows.shape[0]
    Bp = max(8, -(-B // 8) * 8)              # pad rows to a sublane multiple for the stack
    if Bp != B:
        x_rows = jnp.concatenate(
            [x_rows, jnp.zeros((Bp - B, dx), jnp.float32)], axis=0)
    x_new, p_new = _kf_predict_call(
        jnp.asarray(F, jnp.float32), x_rows,
        jnp.asarray(P, jnp.float32), jnp.asarray(Q, jnp.float32),
        n_steps=int(n_steps), alpha_sq=float(alpha_sq),
    )
    x_new = x_new[:B]
    return (x_new[0] if single else x_new), p_new


def _ref_predict(F, x_rows, P, Q, n_steps, alpha_sq):
    """Pure-JAX reference: n sequential module predicts."""
    x = x_rows
    for _ in range(n_steps):
        x = x @ F.T
        P = alpha_sq * (F @ P @ F.T) + Q
    return x, P


if __name__ == "__main__":
    dim_x = 32
    dim_z = 8   # unused by forward/predict; kept for parity with module __init__
    batch = 8

    key = jax.random.PRNGKey(0)
    k_f, k_x, k_p, k_b = jax.random.split(key, 4)

    # Module defaults are F = I, P = I, Q = I; perturb F and P so the matmuls are exercised.
    F = jnp.eye(dim_x, dtype=jnp.float32) + 0.01 * jax.random.normal(k_f, (dim_x, dim_x), jnp.float32)
    Pm = jnp.eye(dim_x, dtype=jnp.float32) + 0.1 * jnp.abs(jax.random.normal(k_p, (dim_x, dim_x), jnp.float32))
    Pm = 0.5 * (Pm + Pm.T)                      # keep covariance symmetric
    Q = jnp.eye(dim_x, dtype=jnp.float32)
    x = jax.random.normal(k_x, (dim_x,), jnp.float32)
    x_batch = jax.random.normal(k_b, (batch, dim_x), jnp.float32)

    # Fresh P copies per call (each call donates its P argument).
    P1 = Pm + 0.0
    P2 = Pm + 0.0
    P3 = Pm + 0.0

    # Pure-JAX references — computed BEFORE the kernel calls since P buffers are donated.
    x1_ref, p1_ref = _ref_predict(F, x.reshape(1, dim_x), Pm, Q, 1, 1.0)
    x2_ref, p2_ref = _ref_predict(F, x_batch, Pm, Q, 3, 1.0)
    x3_ref, p3_ref = _ref_predict(F, x.reshape(1, dim_x), Pm, Q, 2, 1.5)
    jax.block_until_ready((x1_ref, p1_ref, x2_ref, p2_ref, x3_ref, p3_ref))

    # 1) Exact module forward semantics: single (dim_x,) state, one step, alpha_sq=1.
    x1, p1 = kalman_predict(F, x, P1, Q)
    jax.block_until_ready((x1, p1))
    assert x1.shape == (dim_x,)
    assert jnp.allclose(x1, x1_ref[0], atol=1e-4, rtol=1e-4)
    assert jnp.allclose(p1, p1_ref, atol=1e-4, rtol=1e-4)

    # 2) Batched states sharing F/P/Q, 3 fused predict steps in one kernel call.
    x2, p2 = kalman_predict(F, x_batch, P2, Q, n_steps=3)
    jax.block_until_ready((x2, p2))
    assert x2.shape == (batch, dim_x)
    assert jnp.allclose(x2, x2_ref, atol=1e-4, rtol=1e-4)
    assert jnp.allclose(p2, p2_ref, atol=1e-4, rtol=1e-4)

    # 3) Non-default alpha_sq (fading-memory filter), 2 fused steps, single state.
    x3, p3 = kalman_predict(F, x, P3, Q, n_steps=2, alpha_sq=1.5)
    jax.block_until_ready((x3, p3))
    assert jnp.allclose(x3, x3_ref[0], atol=1e-4, rtol=1e-4)
    assert jnp.allclose(p3, p3_ref, atol=1e-4, rtol=1e-4)

    print("KERNEL_OK")
</pallas_src>

<mosaic_0001>
module attributes {stable_mosaic.version = 11 : i64} {
  func.func @kernel(%arg0: memref<32x32xf32, #tpu.memory_space<vmem>>, %arg1: memref<8x32xf32, #tpu.memory_space<vmem>>, %arg2: memref<32x32xf32, #tpu.memory_space<vmem>>, %arg3: memref<32x32xf32, #tpu.memory_space<vmem>>, %arg4: memref<8x32xf32, #tpu.memory_space<vmem>>, %arg5: memref<32x32xf32, #tpu.memory_space<vmem>>, %arg6: memref<40x32xf32, #tpu.memory_space<vmem>>) attributes {dimension_semantics = [], scalar_prefetch = 0 : i64, scratch_operands = 1 : i64, tpu.core_type = #tpu.core_type<tc>} {
    %c0 = arith.constant 0 : index
    %c0_0 = arith.constant 0 : index
    %0 = vector.load %arg0[%c0, %c0_0] : memref<32x32xf32, #tpu.memory_space<vmem>>, vector<32x32xf32>
    %c0_1 = arith.constant 0 : index
    %c0_2 = arith.constant 0 : index
    %1 = vector.load %arg3[%c0_1, %c0_2] : memref<32x32xf32, #tpu.memory_space<vmem>>, vector<32x32xf32>
    %c0_3 = arith.constant 0 : index
    %c0_4 = arith.constant 0 : index
    %2 = vector.load %arg1[%c0_3, %c0_4] : memref<8x32xf32, #tpu.memory_space<vmem>>, vector<8x32xf32>
    %c0_5 = arith.constant 0 : index
    %c0_6 = arith.constant 0 : index
    %3 = vector.load %arg4[%c0_5, %c0_6] : memref<8x32xf32, #tpu.memory_space<vmem>>, vector<8x32xf32>
    tpu.vector_store %arg4[%c0_5, %c0_6], %2 {strides = array<i32>} : memref<8x32xf32, #tpu.memory_space<vmem>>, vector<8x32xf32>,
    %c0_7 = arith.constant 0 : index
    %c0_8 = arith.constant 0 : index
    %4 = vector.load %arg2[%c0_7, %c0_8] : memref<32x32xf32, #tpu.memory_space<vmem>>, vector<32x32xf32>
    %c0_9 = arith.constant 0 : index
    %c0_10 = arith.constant 0 : index
    %5 = vector.load %arg5[%c0_9, %c0_10] : memref<32x32xf32, #tpu.memory_space<vmem>>, vector<32x32xf32>
    tpu.vector_store %arg5[%c0_9, %c0_10], %4 {strides = array<i32>} : memref<32x32xf32, #tpu.memory_space<vmem>>, vector<32x32xf32>,
    %c0_11 = arith.constant 0 : index
    %c0_12 = arith.constant 0 : index
    %6 = vector.load %arg5[%c0_11, %c0_12] : memref<32x32xf32, #tpu.memory_space<vmem>>, vector<32x32xf32>
    %cst = arith.constant dense<0.000000e+00> : vector<32x32xf32>
    %7 = tpu.matmul %0, %6, %cst {dimension_numbers = #tpu.dot_dimension_numbers<[1], [0], [0], [1], [0, 0, 1, 1], [], []>} : vector<32x32xf32>, vector<32x32xf32>, vector<32x32xf32> -> vector<32x32xf32>
    %c0_13 = arith.constant 0 : index
    %c0_14 = arith.constant 0 : index
    %8 = vector.load %arg4[%c0_13, %c0_14] : memref<8x32xf32, #tpu.memory_space<vmem>>, vector<8x32xf32>
    %c0_15 = arith.constant 0 : index
    %c0_16 = arith.constant 0 : index
    %9 = vector.load %arg6[%c0_15, %c0_16] : memref<40x32xf32, #tpu.memory_space<vmem>>, vector<8x32xf32>
    tpu.vector_store %arg6[%c0_15, %c0_16], %8 {strides = array<i32>} : memref<40x32xf32, #tpu.memory_space<vmem>>, vector<8x32xf32>,
    %c8 = arith.constant 8 : index
    %c0_17 = arith.constant 0 : index
    %10 = vector.load %arg6[%c8, %c0_17] : memref<40x32xf32, #tpu.memory_space<vmem>>, vector<32x32xf32>
    tpu.vector_store %arg6[%c8, %c0_17], %7 {strides = array<i32>} : memref<40x32xf32, #tpu.memory_space<vmem>>, vector<32x32xf32>,
    %c0_18 = arith.constant 0 : index
    %c0_19 = arith.constant 0 : index
    %11 = vector.load %arg6[%c0_18, %c0_19] : memref<40x32xf32, #tpu.memory_space<vmem>>, vector<40x32xf32>
    %cst_20 = arith.constant dense<0.000000e+00> : vector<40x32xf32>
    %12 = tpu.matmul %11, %0, %cst_20 {dimension_numbers = #tpu.dot_dimension_numbers<[1], [1], [0], [0], [0, 0, 1, 0], [], []>} : vector<40x32xf32>, vector<32x32xf32>, vector<40x32xf32> -> vector<40x32xf32>
    %13 = vector.extract_strided_slice %12 {offsets = [0, 0], sizes = [8, 32], strides = [1, 1]} : vector<40x32xf32> to vector<8x32xf32>
    %c0_21 = arith.constant 0 : index
    %c0_22 = arith.constant 0 : index
    %14 = vector.load %arg4[%c0_21, %c0_22] : memref<8x32xf32, #tpu.memory_space<vmem>>, vector<8x32xf32>
    tpu.vector_store %arg4[%c0_21, %c0_22], %13 {strides = array<i32>} : memref<8x32xf32, #tpu.memory_space<vmem>>, vector<8x32xf32>,
    %15 = vector.extract_strided_slice %12 {offsets = [8, 0], sizes = [32, 32], strides = [1, 1]} : vector<40x32xf32> to vector<32x32xf32>
    %16 = arith.addf %15, %1 : vector<32x32xf32>
    %c0_23 = arith.constant 0 : index
    %c0_24 = arith.constant 0 : index
    %17 = vector.load %arg5[%c0_23, %c0_24] : memref<32x32xf32, #tpu.memory_space<vmem>>, vector<32x32xf32>
    tpu.vector_store %arg5[%c0_23, %c0_24], %16 {strides = array<i32>} : memref<32x32xf32, #tpu.memory_space<vmem>>, vector<32x32xf32>,
    return
  }
}

</mosaic_0001>

<llo_original>
// kernel: _kf_predict_call.1
$region0: #{_kf_predict_call.1}
  #allocation0 [shape = 'u32[]', space=smem, size = 0x4, offset = 0x4, fixed_abs, tag = 'smem constant byte address 0x4 - core index']
  #allocation1 [shape = 'u32[72,128]{1,0:T(1,128)}', space=vmem, size = 0x9000, scoped, tag = 'internal scratch']
  #allocation2 [shape = 'f32[40,32]{1,0:T(8,128)}', space=vmem, size = 0x5000, scoped, tag = 'scratch operand']
  %s0 = inlined_call_operand.hbm [shape: f32[32,32], index: 0, kind: input, shape index: {}]
  %s1 = inlined_call_operand.hbm [shape: f32[8,32], index: 1, kind: input, shape index: {}]
  %s2 = inlined_call_operand.hbm [shape: f32[32,32], index: 2, kind: input, shape index: {}, may-alias: {2,5}]
  %s3 = inlined_call_operand.hbm [shape: f32[32,32], index: 3, kind: input, shape index: {}]
  %s4 = inlined_call_operand.hbm [shape: f32[8,32], index: 4, kind: output, shape index: {0}]
  %s5 = inlined_call_operand.hbm [shape: f32[32,32], index: 5, kind: output, shape index: {1}, may-alias: {2,5}]
  %6 = xla_tuple %s4, %s5
  %s7 = sld [smem:[#allocation0]]
  $region50: #{_kf_predict_call.1} parent=0
    _
  %s9 = ssub.s32 1, %s7
  %s10 = scalar_select 0, %s9, %s7
  $region1: #{_kf_predict_call.1} parent=0
    #allocation3 [shape = 'u8[16384]{0}', space=vmem, size = 0x4000, scoped, tag = 'input window, operand 0, single buffered']
    #allocation4 [shape = 's32[1]{0}', space=sflag, size = 0x4, scoped, tag = 'scoped memory for _kf_predict_call.1']
    #allocation5 [shape = 's32[1]{0}', space=sflag, size = 0x4, scoped, tag = 'scoped memory for _kf_predict_call.1']
    #allocation6 [shape = 'u8[4096]{0}', space=vmem, size = 0x1000, scoped, tag = 'input window, operand 1, single buffered']
    #allocation7 [shape = 's32[1]{0}', space=sflag, size = 0x4, scoped, tag = 'scoped memory for _kf_predict_call.1']
    #allocation8 [shape = 'u8[16384]{0}', space=vmem, size = 0x4000, scoped, tag = 'input window, operand 2, single buffered']
    #allocation9 [shape = 'u8[16384]{0}', space=vmem, size = 0x4000, scoped, tag = 'input window, operand 3, single buffered']
    #allocation10 [shape = 's32[1]{0}', space=sflag, size = 0x4, scoped, tag = 'scoped memory for _kf_predict_call.1']
    #allocation11 [shape = 'u8[4096]{0}', space=vmem, size = 0x1000, scoped, tag = 'output window, operand 0, single buffered']
    #allocation12 [shape = 'u8[16384]{0}', space=vmem, size = 0x4000, scoped, tag = 'output window, operand 1, single buffered']
    #allocation13 [shape = 's32[1]{0}', space=sflag, size = 0x4, scoped, tag = 'scoped memory for _kf_predict_call.1']
    %11 = vsyncpa [#allocation4], 0
    %12 = vsyncpa [#allocation7], 0
    %13 = vsyncpa [#allocation10], 0
    %14 = vsyncpa [#allocation5], 0
    %15 = vsyncpa [#allocation13], 0
    // Predicated region
    $region2: #{_kf_predict_call.1} parent=1 // pred_check
      _
    $region3: #{_kf_predict_call.1} parent=1 // pred_check_branch
      %17 = sbr.rel (0) target = $region5
    $region4: #{_kf_predict_call.1} parent=1 // pred_region
      %19 = vsyncadd [#allocation4], 0
      %s20 = sshll.u32 %s0, 4
      %s21 = int_to_ptr.hbm [resolvable:$true] %s20
      %s22 = sshll.u32 [#allocation3], 4
      %s23 = int_to_ptr.vmem [resolvable:$true] %s22
      %28 = dma.hbm_to_vmem [thread:$0]  %s21, 512, %s23, [#allocation4], 128, 128, 8
    $region5: #{_kf_predict_call.1} parent=1 // pred_fallthru
      _
    // Predicated region
    $region6: #{_kf_predict_call.1} parent=1 // pred_check
      _
    $region7: #{_kf_predict_call.1} parent=1 // pred_check_branch
      %30 = sbr.rel (0) target = $region9
    $region8: #{_kf_predict_call.1} parent=1 // pred_region
      %32 = vsyncadd [#allocation7], 0
      %s34 = sshll.u32 %s1, 4
      %s35 = int_to_ptr.hbm [resolvable:$true] %s34
      %s36 = sshll.u32 [#allocation6], 4
      %s37 = int_to_ptr.vmem [resolvable:$true] %s36
      %39 = dma.hbm_to_vmem [thread:$0]  %s35, 128, %s37, [#allocation7]
    $region9: #{_kf_predict_call.1} parent=1 // pred_fallthru
      _
    // Predicated region
    $region10: #{_kf_predict_call.1} parent=1 // pred_check
      _
    $region11: #{_kf_predict_call.1} parent=1 // pred_check_branch
      %41 = sbr.rel (0) target = $region13
    $region12: #{_kf_predict_call.1} parent=1 // pred_region
      %43 = vsyncadd [#allocation7], 0
      %s44 = sshll.u32 %s2, 4
      %s45 = int_to_ptr.hbm [resolvable:$true] %s44
      %s46 = sshll.u32 [#allocation8], 4
      %s47 = int_to_ptr.vmem [resolvable:$true] %s46
      %52 = dma.hbm_to_vmem [thread:$0]  %s45, 512, %s47, [#allocation7], 128, 128, 8
    $region13: #{_kf_predict_call.1} parent=1 // pred_fallthru
      _
    // Predicated region
    $region14: #{_kf_predict_call.1} parent=1 // pred_check
      _
    $region15: #{_kf_predict_call.1} parent=1 // pred_check_branch
      %54 = sbr.rel (0) target = $region17
    $region16: #{_kf_predict_call.1} parent=1 // pred_region
      %56 = vsyncadd [#allocation10], 0
      %s57 = sshll.u32 %s3, 4
      %s58 = int_to_ptr.hbm [resolvable:$true] %s57
      %s59 = sshll.u32 [#allocation9], 4
      %s60 = int_to_ptr.vmem [resolvable:$true] %s59
      %65 = dma.hbm_to_vmem [thread:$0]  %s58, 512, %s60, [#allocation10], 128, 128, 8
    $region17: #{_kf_predict_call.1} parent=1 // pred_fallthru
      _
    // Predicated region
    $region18: #{_kf_predict_call.1} parent=1 // pred_check
      _
    $region19: #{_kf_predict_call.1} parent=1 // pred_check_branch
      %67 = sbr.rel (0) target = $region21
    $region20: #{_kf_predict_call.1} parent=1 // pred_region
      %69 = dma.done [#allocation4], 512
    $region21: #{_kf_predict_call.1} parent=1 // pred_fallthru
      _
    // Predicated region
    $region22: #{_kf_predict_call.1} parent=1 // pred_check
      _
    $region23: #{_kf_predict_call.1} parent=1 // pred_check_branch
      %71 = sbr.rel (0) target = $region25
    $region24: #{_kf_predict_call.1} parent=1 // pred_region
      %73 = dma.done [#allocation7], 128
    $region25: #{_kf_predict_call.1} parent=1 // pred_fallthru
      _
    // Predicated region
    $region26: #{_kf_predict_call.1} parent=1 // pred_check
      _
    $region27: #{_kf_predict_call.1} parent=1 // pred_check_branch
      %75 = sbr.rel (0) target = $region29
    $region28: #{_kf_predict_call.1} parent=1 // pred_region
      %77 = dma.done [#allocation7], 512
    $region29: #{_kf_predict_call.1} parent=1 // pred_fallthru
      _
    // Predicated region
    $region30: #{_kf_predict_call.1} parent=1 // pred_check
      _
    $region31: #{_kf_predict_call.1} parent=1 // pred_check_branch
      %79 = sbr.rel (0) target = $region33
    $region32: #{_kf_predict_call.1} parent=1 // pred_region
      %81 = dma.done [#allocation10], 512
    $region33: #{_kf_predict_call.1} parent=1 // pred_fallthru
      _
    %v82 = vld [vmem:[#allocation3] sm:$0xff]
    %v83 = vld [vmem:[#allocation3 + $0x8] sm:$0xff]
    %v84 = vld [vmem:[#allocation3 + $0x10] sm:$0xff]
    %v85 = vld [vmem:[#allocation3 + $0x18] sm:$0xff]
    %v86 = vld [vmem:[#allocation9] sm:$0xff]
    %v87 = vld [vmem:[#allocation9 + $0x8] sm:$0xff]
    %v88 = vld [vmem:[#allocation9 + $0x10] sm:$0xff]
    %v89 = vld [vmem:[#allocation9 + $0x18] sm:$0xff]
    %v90 = vld [vmem:[#allocation6] sm:$0xff]
    %vm91 = vcmask 261120
    %92 = vst.msk [vmem:[#allocation11] sm:$0xff] %vm91, %v90
    %v93 = vld [vmem:[#allocation8] sm:$0xff]
    %v94 = vld [vmem:[#allocation8 + $0x8] sm:$0xff]
    %v95 = vld [vmem:[#allocation8 + $0x10] sm:$0xff]
    %v96 = vld [vmem:[#allocation8 + $0x18] sm:$0xff]
    %97 = vst.msk [vmem:[#allocation12] sm:$0xff] %vm91, %v93
    %98 = vst.msk [vmem:[#allocation12 + $0x8] sm:$0xff] %vm91, %v94
    %99 = vst.msk [vmem:[#allocation12 + $0x10] sm:$0xff] %vm91, %v95
    %100 = vst.msk [vmem:[#allocation12 + $0x18] sm:$0xff] %vm91, %v96
    %v101 = vld [vmem:[#allocation12] sm:$0xff]
    %v102 = vld [vmem:[#allocation12 + $0x8] sm:$0xff]
    %v103 = vld [vmem:[#allocation12 + $0x10] sm:$0xff]
    %v104 = vld [vmem:[#allocation12 + $0x18] sm:$0xff]
    %v106 = vsel %vm91, %v82, 0
    %v109 = vsel %vm91, %v83, 0
    %v112 = vsel %vm91, %v84, 0
    %v115 = vsel %vm91, %v85, 0
    %117 = vmatpush.msra.mxu0 0.0
    %118 = vmatpush.msra.mxu0 0.0
    %119 = vmatpush.msra.mxu0 0.0
    %120 = vmatpush.msra.mxu0 0.0
    %121 = vmatpush.msra.mxu0 0.0
    %122 = vmatpush.msra.mxu0 0.0
    %123 = vmatpush.msra.mxu0 0.0
    %124 = vmatpush.msra.mxu0 0.0
    %125 = vmatpush.msra.mxu0 0.0
    %126 = vmatpush.msra.mxu0 0.0
    %127 = vmatpush.msra.mxu0 0.0
    %128 = vmatpush.msra.mxu0 0.0
    %129 = vmatpush.msra.mxu0 %v104
    %130 = vmatpush.msra.mxu0 %v103
    %131 = vmatpush.msra.mxu0 %v102
    %132 = vmatpush.msra.mxu0 %v101
    %133 = vmatmul.f32.gmra.mxu0 %v106
    %v134 = vpop.f32.mrf.mxu0
    %v135 = vadd.f32 0.0, %v134
    %136 = vmatmul.f32.gmra.mxu0 %v109
    %v137 = vpop.f32.mrf.mxu0
    %v138 = vadd.f32 0.0, %v137
    %139 = vmatmul.f32.gmra.mxu0 %v112
    %v140 = vpop.f32.mrf.mxu0
    %v141 = vadd.f32 0.0, %v140
    %142 = vmatmul.f32.gmra.mxu0 %v115
    %v143 = vpop.f32.mrf.mxu0
    %v144 = vadd.f32 0.0, %v143
    %145 = vdwg.mxu0
    %v146 = vld [vmem:[#allocation11] sm:$0xff]
    %147 = vst.msk [vmem:[#allocation2] sm:$0xff] %vm91, %v146
    %148 = vst.msk [vmem:[#allocation2 + $0x8] sm:$0xff] %vm91, %v135
    %149 = vst.msk [vmem:[#allocation2 + $0x10] sm:$0xff] %vm91, %v138
    %150 = vst.msk [vmem:[#allocation2 + $0x18] sm:$0xff] %vm91, %v141
    %151 = vst.msk [vmem:[#allocation2 + $0x20] sm:$0xff] %vm91, %v144
    %v152 = vld [vmem:[#allocation2] sm:$0xff]
    %v153 = vld [vmem:[#allocation2 + $0x8] sm:$0xff]
    %v154 = vld [vmem:[#allocation2 + $0x10] sm:$0xff]
    %v155 = vld [vmem:[#allocation2 + $0x18] sm:$0xff]
    %v156 = vld [vmem:[#allocation2 + $0x20] sm:$0xff]
    %v158 = vsel %vm91, %v152, 0
    %v161 = vsel %vm91, %v153, 0
    %v164 = vsel %vm91, %v154, 0
    %v167 = vsel %vm91, %v155, 0
    %v170 = vsel %vm91, %v156, 0
    %172 = vmatpush.xpose.msra.mxu0 0.0
    %173 = vmatpush.xpose.msra.mxu0 0.0
    %174 = vmatpush.xpose.msra.mxu0 0.0
    %175 = vmatpush.xpose.msra.mxu0 0.0
    %176 = vmatpush.xpose.msra.mxu0 0.0
    %177 = vmatpush.xpose.msra.mxu0 0.0
    %178 = vmatpush.xpose.msra.mxu0 0.0
    %179 = vmatpush.xpose.msra.mxu0 0.0
    %180 = vmatpush.xpose.msra.mxu0 0.0
    %181 = vmatpush.xpose.msra.mxu0 0.0
    %182 = vmatpush.xpose.msra.mxu0 0.0
    %183 = vmatpush.xpose.msra.mxu0 0.0
    %184 = vmatpush.xpose.msra.mxu0 %v115
    %185 = vmatpush.xpose.msra.mxu0 %v112
    %186 = vmatpush.xpose.msra.mxu0 %v109
    %187 = vmatpush.xpose.msra.mxu0 %v106
    %188 = vmatmul.f32.gmra.mxu0 %v158
    %v189 = vpop.f32.mrf.mxu0
    %v190 = vadd.f32 0.0, %v189
    %191 = vmatmul.f32.gmra.mxu0 %v161
    %v192 = vpop.f32.mrf.mxu0
    %v193 = vadd.f32 0.0, %v192
    %194 = vmatmul.f32.gmra.mxu0 %v164
    %v195 = vpop.f32.mrf.mxu0
    %v196 = vadd.f32 0.0, %v195
    %197 = vmatmul.f32.gmra.mxu0 %v167
    %v198 = vpop.f32.mrf.mxu0
    %v199 = vadd.f32 0.0, %v198
    %200 = vmatmul.f32.gmra.mxu0 %v170
    %v201 = vpop.f32.mrf.mxu0
    %v202 = vadd.f32 0.0, %v201
    %203 = vdwg.mxu0
    %204 = vst.msk [vmem:[#allocation11] sm:$0xff] %vm91, %v190
    %v205 = vadd.f32 %v193, %v86
    %v206 = vadd.f32 %v196, %v87
    %v207 = vadd.f32 %v199, %v88
    %v208 = vadd.f32 %v202, %v89
    %209 = vst.msk [vmem:[#allocation12] sm:$0xff] %vm91, %v205
    %210 = vst.msk [vmem:[#allocation12 + $0x8] sm:$0xff] %vm91, %v206
    %211 = vst.msk [vmem:[#allocation12 + $0x10] sm:$0xff] %vm91, %v207
    %212 = vst.msk [vmem:[#allocation12 + $0x18] sm:$0xff] %vm91, %v208
    // Predicated region
    $region34: #{_kf_predict_call.1} parent=1 // pred_check
      _
    $region35: #{_kf_predict_call.1} parent=1 // pred_check_branch
      %214 = sbr.rel (0) target = $region37
    $region36: #{_kf_predict_call.1} parent=1 // pred_region
      %216 = vsyncadd [#allocation5], 0
      %s218 = sshll.u32 [#allocation11], 4
      %s219 = int_to_ptr.vmem [resolvable:$true] %s218
      %s220 = sshll.u32 %s4, 4
      %s221 = int_to_ptr.hbm [resolvable:$true] %s220
      %223 = dma.vmem_to_hbm [thread:$0]  %s219, 128, %s221, [#allocation5]
    $region37: #{_kf_predict_call.1} parent=1 // pred_fallthru
      _
    // Predicated region
    $region38: #{_kf_predict_call.1} parent=1 // pred_check
      _
    $region39: #{_kf_predict_call.1} parent=1 // pred_check_branch
      %225 = sbr.rel (0) target = $region41
    $region40: #{_kf_predict_call.1} parent=1 // pred_region
      %227 = vsyncadd [#allocation13], 0
      %s228 = sshll.u32 [#allocation12], 4
      %s229 = int_to_ptr.vmem [resolvable:$true] %s228
      %s230 = sshll.u32 %s5, 4
      %s231 = int_to_ptr.hbm [resolvable:$true] %s230
      %236 = dma.vmem_to_hbm [thread:$0]  %s229, 512, %s231, [#allocation13], 128, 128, 8
    $region41: #{_kf_predict_call.1} parent=1 // pred_fallthru
      _
    // Predicated region
    $region42: #{_kf_predict_call.1} parent=1 // pred_check
      _
    $region43: #{_kf_predict_call.1} parent=1 // pred_check_branch
      %238 = sbr.rel (0) target = $region45
    $region44: #{_kf_predict_call.1} parent=1 // pred_region
      %240 = dma.done [#allocation5], 128
    $region45: #{_kf_predict_call.1} parent=1 // pred_fallthru
      _
    // Predicated region
    $region46: #{_kf_predict_call.1} parent=1 // pred_check
      _
    $region47: #{_kf_predict_call.1} parent=1 // pred_check_branch
      %242 = sbr.rel (0) target = $region49
    $region48: #{_kf_predict_call.1} parent=1 // pred_region
      %244 = dma.done [#allocation13], 512
    $region49: #{_kf_predict_call.1} parent=1 // pred_fallthru
      _
    %245 = vsyncpa [#allocation4], 1
    %246 = vsyncpa [#allocation7], 1
    %247 = vsyncpa [#allocation10], 1
    %248 = vsyncpa [#allocation5], 1
    %249 = vsyncpa [#allocation13], 1

</llo_original>
